<compile_context>
chip_gen: v5e
topology: v5e:2x2
jax: 0.10.0
libtpu: 0.0.40
codegen_flags: <defaults>
</compile_context>

<pallas_src>
import jax
import jax.numpy as jnp
from jax.experimental import pallas as pl
from jax.experimental.pallas import tpu as pltpu


LANE = 128  # lane-dense padding target for the discriminator logit column


# ---------------------------------------------------------------------------
# Fused Pallas kernel: Generator MLP + Discriminator MLP on [real ; fake]
# ---------------------------------------------------------------------------
def fused_gan_kernel(x_ref, gw1_ref, gb1_ref, gw2_ref, gb2_ref,
                     dw1_ref, db1_ref, dw2_ref, db2_ref,
                     gen_ref, disc_ref, stack_ref):
    x = x_ref[...]                                   # (B, D) bf16
    B = x.shape[0]

    # ---------------- Generator: x @ GW1 + gb1 -> ReLU -> @ GW2 + gb2 ----------------
    gh = jnp.dot(x, gw1_ref[...], preferred_element_type=jnp.float32) + gb1_ref[...]
    gh = jnp.maximum(gh, 0.0).astype(x.dtype)        # bf16 back into the MXU
    g_f32 = jnp.dot(gh, gw2_ref[...], preferred_element_type=jnp.float32) + gb2_ref[...]
    gen_ref[...] = g_f32.astype(gen_ref.dtype)       # generator feature output (B, D)

    # -------- Build the [real_A ; G_A] stack in VMEM scratch (no HBM concat) --------
    stack_ref[0:B, :] = x                            # rows [0, B)   = real
    stack_ref[B:2 * B, :] = g_f32.astype(x.dtype)    # rows [B, 2B)  = fake
    stack = stack_ref[...]                           # (2B, D) bf16

    # -------- Discriminator: single matmul per layer over the stacked rows --------
    dh = jnp.dot(stack, dw1_ref[...], preferred_element_type=jnp.float32) + db1_ref[...]
    dh = jnp.maximum(dh, 0.0).astype(x.dtype)
    logits = jnp.dot(dh, dw2_ref[...], preferred_element_type=jnp.float32) + db2_ref[...]

    disc_ref[...] = logits.astype(disc_ref.dtype)    # one unmasked (2B, LANE) store


def fused_gan_forward(x, gp, dp):
    """Run the fused Generator+Discriminator kernel.

    x  : (B, D) f32 real input
    gp : generator MLP params  (w1 (D,H) bf16, b1 (1,H) f32, w2 (H,D) bf16, b2 (1,D) f32)
    dp : discriminator MLP params, w2/b2 lane-padded to LANE columns (col 0 meaningful)
    Returns (gen_feat (B, D) f32, disc_logits (2B,) f32).
    """
    B, D = x.shape
    H = gp["w1"].shape[1]
    gen_out = gp["w2"].shape[1]
    disc_out_pad = dp["w2"].shape[1]

    x_lo = x.astype(gp["w1"].dtype)   # bf16 activations into the MXU

    flops = (2 * B * D * H + 2 * B * H * gen_out                       # generator
             + 2 * (2 * B) * D * H + 2 * (2 * B) * H * disc_out_pad)   # discriminator
    operands = (x_lo, gp["w1"], gp["b1"], gp["w2"], gp["b2"],
                dp["w1"], dp["b1"], dp["w2"], dp["b2"])
    bytes_accessed = (sum(int(a.size) * a.dtype.itemsize for a in operands)
                      + B * gen_out * 4 + 2 * B * disc_out_pad * 4)

    gen_feat, disc_padded = pl.pallas_call(
        fused_gan_kernel,
        out_shape=(
            jax.ShapeDtypeStruct((B, gen_out), jnp.float32),
            jax.ShapeDtypeStruct((2 * B, disc_out_pad), jnp.float32),
        ),
        in_specs=[pl.BlockSpec(memory_space=pltpu.MemorySpace.VMEM)] * 9,
        out_specs=(
            pl.BlockSpec(memory_space=pltpu.MemorySpace.VMEM),
            pl.BlockSpec(memory_space=pltpu.MemorySpace.VMEM),
        ),
        scratch_shapes=[pltpu.VMEM((2 * B, D), x_lo.dtype)],
        cost_estimate=pl.CostEstimate(
            flops=int(flops), transcendentals=0, bytes_accessed=int(bytes_accessed)),
    )(*operands)

    # Logical discriminator out_dim is dp["out_dim"]; the kernel emitted a
    # lane-dense (2B, LANE) slab.  Slice back, mirroring `.squeeze()`.
    logits = disc_padded[:, :dp["out_dim"]]
    if dp["out_dim"] == 1:
        logits = logits[:, 0]
    return gen_feat, logits


# ---------------------------------------------------------------------------
# Deterministic parameter construction for one 2-layer MLP "Model"
# ---------------------------------------------------------------------------
def make_mlp_params(key, d_in, d_hidden, d_out, *, pad_out_to=None,
                    weight_dtype=jnp.bfloat16):
    k1, k2 = jax.random.split(key)
    w1 = (jax.random.normal(k1, (d_in, d_hidden), jnp.float32)
          / jnp.sqrt(jnp.float32(d_in))).astype(weight_dtype)
    b1 = jnp.zeros((1, d_hidden), jnp.float32)
    w2 = (jax.random.normal(k2, (d_hidden, d_out), jnp.float32)
          / jnp.sqrt(jnp.float32(d_hidden))).astype(weight_dtype)
    b2 = jnp.zeros((1, d_out), jnp.float32)
    if pad_out_to is not None and d_out < pad_out_to:
        # Zero-pad the output column(s) up to a lane-dense width; only the first
        # d_out columns are meaningful and the wrapper slices them back out.
        w2 = jnp.pad(w2, ((0, 0), (0, pad_out_to - d_out)))
        b2 = jnp.pad(b2, ((0, 0), (0, pad_out_to - d_out)))
    return {"w1": w1, "b1": b1, "w2": w2, "b2": b2, "out_dim": d_out}


# ---------------------------------------------------------------------------
# build_model forward (mirrors the PyTorch control flow, fused Pallas compute)
# ---------------------------------------------------------------------------
class BuildModelPallas:
    def __init__(self, config, params):
        g_cfg = config["Generator"]
        self.generator_names = list(g_cfg["Generator_Name"])
        self.generator_input = {g: list(inp) for g, inp in zip(self.generator_names,
                                                               g_cfg["Input_Datasets"])}
        d_cfg = config["Discriminator"]
        self.discriminator_names = list(d_cfg["Discriminator_Name"])
        self.discriminator_input = {d: list(inp) for d, inp in zip(self.discriminator_names,
                                                                   d_cfg["Input_Datasets"])}
        self.params = params  # {model_name: mlp params}

    def __call__(self, inputs):
        generator_feats = {}
        discriminator_feats = {}
        confidence = {}

        # Standard GAN pairing: each discriminator consumes [real_dataset, generator].
        # The generator and discriminator forwards for a pair are fused in one kernel.
        # TODO(synk): generalize the fused path to arbitrary Input_Datasets combinations
        # (multiple real datasets / multiple generators per discriminator).
        for d in self.discriminator_names:
            d_in = self.discriminator_input[d]
            real_names = [i for i in d_in if i not in self.generator_names]
            gen_names = [i for i in d_in if i in self.generator_names]
            assert len(real_names) == 1 and len(gen_names) == 1, \
                "fused path expects Input_Datasets of the form [real, generator]"
            real_name, g = real_names[0], gen_names[0]
            assert d_in == [real_name, g], "fused path expects real dataset first"
            assert self.generator_input[g] == [real_name], \
                "fused path expects the generator to consume the same real dataset"

            x = inputs[real_name]
            gen_feat, disc_logits = fused_gan_forward(x, self.params[g], self.params[d])
            generator_feats[g] = gen_feat
            discriminator_feats[d] = disc_logits  # already squeezed: (2B,)

            # confidence: ones for real rows, zeros for generated rows, concat over batch
            pieces = []
            for i in d_in:
                if i in self.generator_names:
                    pieces.append(jnp.zeros((generator_feats[i].shape[0],), jnp.float32))
                else:
                    pieces.append(jnp.ones((inputs[i].shape[0],), jnp.float32))
            confidence[d] = jnp.concatenate(pieces, axis=0)

        return generator_feats, discriminator_feats, confidence


# ---------------------------------------------------------------------------
# main
# ---------------------------------------------------------------------------
if __name__ == "__main__":
    # Lane-dense feature dims (multiples of 128); small, sublane-aligned batch.
    B, D_IN, HID = 8, 128, 128

    config = {
        "Generator": {
            "Generator_Name": ["G_A"],
            "Input_Datasets": [["real_A"]],
        },
        "Discriminator": {
            "Discriminator_Name": ["D_A"],
            "Input_Datasets": [["real_A", "G_A"]],
        },
        # 'Struct' in the original config drives `Model` construction; here it is
        # represented directly by the deterministic MLP parameter dicts below.
    }

    key = jax.random.PRNGKey(0)
    k_in, k_g, k_d = jax.random.split(key, 3)

    params = {
        "G_A": make_mlp_params(k_g, D_IN, HID, D_IN),                    # generator: D -> D
        "D_A": make_mlp_params(k_d, D_IN, HID, 1, pad_out_to=LANE),      # discriminator: D -> 1
    }

    model = BuildModelPallas(config, params)

    inputs = {"real_A": jax.random.normal(k_in, (B, D_IN), jnp.float32)}

    gen_feats, disc_feats, confidence = model(inputs)
    jax.block_until_ready(gen_feats["G_A"])
    jax.block_until_ready(disc_feats["D_A"])
    jax.block_until_ready(confidence["D_A"])

    assert gen_feats["G_A"].shape == (B, D_IN)
    assert disc_feats["D_A"].shape == (2 * B,)
    assert confidence["D_A"].shape == (2 * B,)
    assert bool(jnp.all(jnp.isfinite(gen_feats["G_A"])))
    assert bool(jnp.all(jnp.isfinite(disc_feats["D_A"])))
    # confidence: ones for real_A rows, zeros for generated G_A rows
    assert float(confidence["D_A"][:B].sum()) == B
    assert float(confidence["D_A"][B:].sum()) == 0.0

    print("KERNEL_OK")
</pallas_src>

<mosaic_0001>
module attributes {stable_mosaic.version = 11 : i64} {
  func.func @fused_gan_kernel(%arg0: memref<8x128xbf16, #tpu.memory_space<vmem>>, %arg1: memref<128x128xbf16, #tpu.memory_space<vmem>>, %arg2: memref<1x128xf32, #tpu.memory_space<vmem>>, %arg3: memref<128x128xbf16, #tpu.memory_space<vmem>>, %arg4: memref<1x128xf32, #tpu.memory_space<vmem>>, %arg5: memref<128x128xbf16, #tpu.memory_space<vmem>>, %arg6: memref<1x128xf32, #tpu.memory_space<vmem>>, %arg7: memref<128x128xbf16, #tpu.memory_space<vmem>>, %arg8: memref<1x128xf32, #tpu.memory_space<vmem>>, %arg9: memref<8x128xf32, #tpu.memory_space<vmem>>, %arg10: memref<16x128xf32, #tpu.memory_space<vmem>>, %arg11: memref<16x128xbf16, #tpu.memory_space<vmem>>) attributes {dimension_semantics = [], scalar_prefetch = 0 : i64, scratch_operands = 1 : i64, tpu.core_type = #tpu.core_type<tc>} {
    %c0 = arith.constant 0 : index
    %c0_0 = arith.constant 0 : index
    %0 = vector.load %arg0[%c0, %c0_0] : memref<8x128xbf16, #tpu.memory_space<vmem>>, vector<8x128xbf16>
    %c0_1 = arith.constant 0 : index
    %c0_2 = arith.constant 0 : index
    %1 = vector.load %arg1[%c0_1, %c0_2] : memref<128x128xbf16, #tpu.memory_space<vmem>>, vector<128x128xbf16>
    %cst = arith.constant dense<0.000000e+00> : vector<8x128xf32>
    %2 = tpu.matmul %0, %1, %cst {dimension_numbers = #tpu.dot_dimension_numbers<[1], [0], [0], [1], [0, 0, 1, 1], [], []>} : vector<8x128xbf16>, vector<128x128xbf16>, vector<8x128xf32> -> vector<8x128xf32>
    %c0_3 = arith.constant 0 : index
    %c0_4 = arith.constant 0 : index
    %3 = vector.load %arg2[%c0_3, %c0_4] : memref<1x128xf32, #tpu.memory_space<vmem>>, vector<1x128xf32>
    %4 = vector.broadcast %3 : vector<1x128xf32> to vector<8x128xf32>
    %5 = arith.addf %2, %4 : vector<8x128xf32>
    %cst_5 = arith.constant 0.000000e+00 : f32
    %6 = vector.broadcast %cst_5 : f32 to vector<8x128xf32>
    %7 = arith.maximumf %5, %6 : vector<8x128xf32>
    %8 = arith.truncf %7 : vector<8x128xf32> to vector<8x128xbf16>
    %c0_6 = arith.constant 0 : index
    %c0_7 = arith.constant 0 : index
    %9 = vector.load %arg3[%c0_6, %c0_7] : memref<128x128xbf16, #tpu.memory_space<vmem>>, vector<128x128xbf16>
    %cst_8 = arith.constant dense<0.000000e+00> : vector<8x128xf32>
    %10 = tpu.matmul %8, %9, %cst_8 {dimension_numbers = #tpu.dot_dimension_numbers<[1], [0], [0], [1], [0, 0, 1, 1], [], []>} : vector<8x128xbf16>, vector<128x128xbf16>, vector<8x128xf32> -> vector<8x128xf32>
    %c0_9 = arith.constant 0 : index
    %c0_10 = arith.constant 0 : index
    %11 = vector.load %arg4[%c0_9, %c0_10] : memref<1x128xf32, #tpu.memory_space<vmem>>, vector<1x128xf32>
    %12 = vector.broadcast %11 : vector<1x128xf32> to vector<8x128xf32>
    %13 = arith.addf %10, %12 : vector<8x128xf32>
    %c0_11 = arith.constant 0 : index
    %c0_12 = arith.constant 0 : index
    %14 = vector.load %arg9[%c0_11, %c0_12] : memref<8x128xf32, #tpu.memory_space<vmem>>, vector<8x128xf32>
    tpu.vector_store %arg9[%c0_11, %c0_12], %13 {strides = array<i32>} : memref<8x128xf32, #tpu.memory_space<vmem>>, vector<8x128xf32>,
    %c0_13 = arith.constant 0 : index
    %c0_14 = arith.constant 0 : index
    %15 = vector.load %arg11[%c0_13, %c0_14] : memref<16x128xbf16, #tpu.memory_space<vmem>>, vector<8x128xbf16>
    tpu.vector_store %arg11[%c0_13, %c0_14], %0 {strides = array<i32>} : memref<16x128xbf16, #tpu.memory_space<vmem>>, vector<8x128xbf16>,
    %16 = arith.truncf %13 : vector<8x128xf32> to vector<8x128xbf16>
    %c8 = arith.constant 8 : index
    %c0_15 = arith.constant 0 : index
    %17 = vector.load %arg11[%c8, %c0_15] : memref<16x128xbf16, #tpu.memory_space<vmem>>, vector<8x128xbf16>
    tpu.vector_store %arg11[%c8, %c0_15], %16 {strides = array<i32>} : memref<16x128xbf16, #tpu.memory_space<vmem>>, vector<8x128xbf16>,
    %c0_16 = arith.constant 0 : index
    %c0_17 = arith.constant 0 : index
    %18 = vector.load %arg11[%c0_16, %c0_17] : memref<16x128xbf16, #tpu.memory_space<vmem>>, vector<16x128xbf16>
    %c0_18 = arith.constant 0 : index
    %c0_19 = arith.constant 0 : index
    %19 = vector.load %arg5[%c0_18, %c0_19] : memref<128x128xbf16, #tpu.memory_space<vmem>>, vector<128x128xbf16>
    %cst_20 = arith.constant dense<0.000000e+00> : vector<16x128xf32>
    %20 = tpu.matmul %18, %19, %cst_20 {dimension_numbers = #tpu.dot_dimension_numbers<[1], [0], [0], [1], [0, 0, 1, 1], [], []>} : vector<16x128xbf16>, vector<128x128xbf16>, vector<16x128xf32> -> vector<16x128xf32>
    %c0_21 = arith.constant 0 : index
    %c0_22 = arith.constant 0 : index
    %21 = vector.load %arg6[%c0_21, %c0_22] : memref<1x128xf32, #tpu.memory_space<vmem>>, vector<1x128xf32>
    %22 = vector.broadcast %21 : vector<1x128xf32> to vector<16x128xf32>
    %23 = arith.addf %20, %22 : vector<16x128xf32>
    %cst_23 = arith.constant 0.000000e+00 : f32
    %24 = vector.broadcast %cst_23 : f32 to vector<16x128xf32>
    %25 = arith.maximumf %23, %24 : vector<16x128xf32>
    %26 = arith.truncf %25 : vector<16x128xf32> to vector<16x128xbf16>
    %c0_24 = arith.constant 0 : index
    %c0_25 = arith.constant 0 : index
    %27 = vector.load %arg7[%c0_24, %c0_25] : memref<128x128xbf16, #tpu.memory_space<vmem>>, vector<128x128xbf16>
    %cst_26 = arith.constant dense<0.000000e+00> : vector<16x128xf32>
    %28 = tpu.matmul %26, %27, %cst_26 {dimension_numbers = #tpu.dot_dimension_numbers<[1], [0], [0], [1], [0, 0, 1, 1], [], []>} : vector<16x128xbf16>, vector<128x128xbf16>, vector<16x128xf32> -> vector<16x128xf32>
    %c0_27 = arith.constant 0 : index
    %c0_28 = arith.constant 0 : index
    %29 = vector.load %arg8[%c0_27, %c0_28] : memref<1x128xf32, #tpu.memory_space<vmem>>, vector<1x128xf32>
    %30 = vector.broadcast %29 : vector<1x128xf32> to vector<16x128xf32>
    %31 = arith.addf %28, %30 : vector<16x128xf32>
    %c0_29 = arith.constant 0 : index
    %c0_30 = arith.constant 0 : index
    %32 = vector.load %arg10[%c0_29, %c0_30] : memref<16x128xf32, #tpu.memory_space<vmem>>, vector<16x128xf32>
    tpu.vector_store %arg10[%c0_29, %c0_30], %31 {strides = array<i32>} : memref<16x128xf32, #tpu.memory_space<vmem>>, vector<16x128xf32>,
    return
  }
}

</mosaic_0001>

<llo_original>
// kernel: tpu_custom_call.1
$region0: #{tpu_custom_call.1}
  #allocation0 [shape = 'u32[]', space=smem, size = 0x4, offset = 0x4, fixed_abs, tag = 'smem constant byte address 0x4 - core index']
  #allocation1 [shape = 'u32[72,128]{1,0:T(1,128)}', space=vmem, size = 0x9000, scoped, tag = 'internal scratch']
  #allocation2 [shape = 'bf16[16,128]{1,0:T(8,128)(2,1)}', space=vmem, size = 0x1000, scoped, tag = 'scratch operand']
  %s0 = inlined_call_operand.hbm [shape: bf16[8,128], index: 0, kind: input, shape index: {}]
  %s1 = inlined_call_operand.hbm [shape: bf16[128,128], index: 1, kind: input, shape index: {}]
  %s2 = inlined_call_operand.vmem [shape: f32[1,128], index: 2, kind: input, shape index: {}]
  %s3 = inlined_call_operand.hbm [shape: bf16[128,128], index: 3, kind: input, shape index: {}]
  %s4 = inlined_call_operand.vmem [shape: f32[1,128], index: 4, kind: input, shape index: {}]
  %s5 = inlined_call_operand.hbm [shape: bf16[128,128], index: 5, kind: input, shape index: {}]
  %s6 = inlined_call_operand.vmem [shape: f32[1,128], index: 6, kind: input, shape index: {}]
  %s7 = inlined_call_operand.hbm [shape: bf16[128,128], index: 7, kind: input, shape index: {}]
  %s8 = inlined_call_operand.vmem [shape: f32[1,128], index: 8, kind: input, shape index: {}]
  %s9 = inlined_call_operand.hbm [shape: f32[8,128], index: 9, kind: output, shape index: {0}]
  %s10 = inlined_call_operand.hbm [shape: f32[16,128], index: 10, kind: output, shape index: {1}]
  %11 = xla_tuple %s9, %s10
  %s12 = sld [smem:[#allocation0]]
  $region74: #{tpu_custom_call.1} parent=0
    _
  %s14 = ssub.s32 1, %s12
  %s15 = scalar_select 0, %s14, %s12
  $region1: #{tpu_custom_call.1} parent=0
    #allocation3 [shape = 'u8[2048]{0}', space=vmem, size = 0x800, scoped, tag = 'input window, operand 0, single buffered']
    #allocation4 [shape = 's32[1]{0}', space=sflag, size = 0x4, scoped, tag = 'scoped memory for tpu_custom_call.1']
    #allocation5 [shape = 's32[1]{0}', space=sflag, size = 0x4, scoped, tag = 'scoped memory for tpu_custom_call.1']
    #allocation6 [shape = 'u8[32768]{0}', space=vmem, size = 0x8000, scoped, tag = 'input window, operand 1, single buffered']
    #allocation7 [shape = 's32[1]{0}', space=sflag, size = 0x4, scoped, tag = 'scoped memory for tpu_custom_call.1']
    #allocation8 [shape = 'u8[32768]{0}', space=vmem, size = 0x8000, scoped, tag = 'input window, operand 3, single buffered']
    #allocation9 [shape = 'u8[32768]{0}', space=vmem, size = 0x8000, scoped, tag = 'input window, operand 5, single buffered']
    #allocation10 [shape = 's32[1]{0}', space=sflag, size = 0x4, scoped, tag = 'scoped memory for tpu_custom_call.1']
    #allocation11 [shape = 'u8[32768]{0}', space=vmem, size = 0x8000, scoped, tag = 'input window, operand 7, single buffered']
    #allocation12 [shape = 'u8[4096]{0}', space=vmem, size = 0x1000, scoped, tag = 'output window, operand 0, single buffered']
    #allocation13 [shape = 'u8[8192]{0}', space=vmem, size = 0x2000, scoped, tag = 'output window, operand 1, single buffered']
    #allocation14 [shape = 's32[1]{0}', space=sflag, size = 0x4, scoped, tag = 'scoped memory for tpu_custom_call.1']
    %16 = vsyncpa [#allocation4], 0
    %17 = vsyncpa [#allocation7], 0
    %18 = vsyncpa [#allocation10], 0
    %19 = vsyncpa [#allocation5], 0
    %20 = vsyncpa [#allocation14], 0
    // Predicated region
    $region2: #{tpu_custom_call.1} parent=1 // pred_check
      _
    $region3: #{tpu_custom_call.1} parent=1 // pred_check_branch
      %22 = sbr.rel (0) target = $region5
    $region4: #{tpu_custom_call.1} parent=1 // pred_region
      %24 = vsyncadd [#allocation4], 0
      %s26 = sshll.u32 %s0, 4
      %s27 = int_to_ptr.hbm [resolvable:$true] %s26
      %s28 = sshll.u32 [#allocation3], 4
      %s29 = int_to_ptr.vmem [resolvable:$true] %s28
      %31 = dma.hbm_to_vmem [thread:$0]  %s27, 64, %s29, [#allocation4]
    $region5: #{tpu_custom_call.1} parent=1 // pred_fallthru
      _
    // Predicated region
    $region6: #{tpu_custom_call.1} parent=1 // pred_check
      _
    $region7: #{tpu_custom_call.1} parent=1 // pred_check_branch
      %33 = sbr.rel (0) target = $region9
    $region8: #{tpu_custom_call.1} parent=1 // pred_region
      %35 = vsyncadd [#allocation7], 0
      %s36 = sshll.u32 %s1, 4
      %s37 = int_to_ptr.hbm [resolvable:$true] %s36
      %s38 = sshll.u32 [#allocation6], 4
      %s39 = int_to_ptr.vmem [resolvable:$true] %s38
      %44 = dma.hbm_to_vmem [thread:$0]  %s37, 1024, %s39, [#allocation7], 64, 64, 4
    $region9: #{tpu_custom_call.1} parent=1 // pred_fallthru
      _
    // Predicated region
    $region10: #{tpu_custom_call.1} parent=1 // pred_check
      _
    $region11: #{tpu_custom_call.1} parent=1 // pred_check_branch
      %46 = sbr.rel (0) target = $region13
    $region12: #{tpu_custom_call.1} parent=1 // pred_region
      _
    $region13: #{tpu_custom_call.1} parent=1 // pred_fallthru
      _
    // Predicated region
    $region14: #{tpu_custom_call.1} parent=1 // pred_check
      _
    $region15: #{tpu_custom_call.1} parent=1 // pred_check_branch
      %48 = sbr.rel (0) target = $region17
    $region16: #{tpu_custom_call.1} parent=1 // pred_region
      %50 = vsyncadd [#allocation7], 0
      %s51 = sshll.u32 %s3, 4
      %s52 = int_to_ptr.hbm [resolvable:$true] %s51
      %s53 = sshll.u32 [#allocation8], 4
      %s54 = int_to_ptr.vmem [resolvable:$true] %s53
      %59 = dma.hbm_to_vmem [thread:$0]  %s52, 1024, %s54, [#allocation7], 64, 64, 4
    $region17: #{tpu_custom_call.1} parent=1 // pred_fallthru
      _
    // Predicated region
    $region18: #{tpu_custom_call.1} parent=1 // pred_check
      _
    $region19: #{tpu_custom_call.1} parent=1 // pred_check_branch
      %61 = sbr.rel (0) target = $region21
    $region20: #{tpu_custom_call.1} parent=1 // pred_region
      _
    $region21: #{tpu_custom_call.1} parent=1 // pred_fallthru
      _
    // Predicated region
    $region22: #{tpu_custom_call.1} parent=1 // pred_check
      _
    $region23: #{tpu_custom_call.1} parent=1 // pred_check_branch
      %63 = sbr.rel (0) target = $region25
    $region24: #{tpu_custom_call.1} parent=1 // pred_region
      %65 = vsyncadd [#allocation10], 0
      %s66 = sshll.u32 %s5, 4
      %s67 = int_to_ptr.hbm [resolvable:$true] %s66
      %s68 = sshll.u32 [#allocation9], 4
      %s69 = int_to_ptr.vmem [resolvable:$true] %s68
      %74 = dma.hbm_to_vmem [thread:$0]  %s67, 1024, %s69, [#allocation10], 64, 64, 4
    $region25: #{tpu_custom_call.1} parent=1 // pred_fallthru
      _
    // Predicated region
    $region26: #{tpu_custom_call.1} parent=1 // pred_check
      _
    $region27: #{tpu_custom_call.1} parent=1 // pred_check_branch
      %76 = sbr.rel (0) target = $region29
    $region28: #{tpu_custom_call.1} parent=1 // pred_region
      _
    $region29: #{tpu_custom_call.1} parent=1 // pred_fallthru
      _
    // Predicated region
    $region30: #{tpu_custom_call.1} parent=1 // pred_check
      _
    $region31: #{tpu_custom_call.1} parent=1 // pred_check_branch
      %78 = sbr.rel (0) target = $region33
    $region32: #{tpu_custom_call.1} parent=1 // pred_region
      %80 = vsyncadd [#allocation10], 0
      %s81 = sshll.u32 %s7, 4
      %s82 = int_to_ptr.hbm [resolvable:$true] %s81
      %s83 = sshll.u32 [#allocation11], 4
      %s84 = int_to_ptr.vmem [resolvable:$true] %s83
      %89 = dma.hbm_to_vmem [thread:$0]  %s82, 1024, %s84, [#allocation10], 64, 64, 4
    $region33: #{tpu_custom_call.1} parent=1 // pred_fallthru
      _
    // Predicated region
    $region34: #{tpu_custom_call.1} parent=1 // pred_check
      _
    $region35: #{tpu_custom_call.1} parent=1 // pred_check_branch
      %91 = sbr.rel (0) target = $region37
    $region36: #{tpu_custom_call.1} parent=1 // pred_region
      _
    $region37: #{tpu_custom_call.1} parent=1 // pred_fallthru
      _
    // Predicated region
    $region38: #{tpu_custom_call.1} parent=1 // pred_check
      _
    $region39: #{tpu_custom_call.1} parent=1 // pred_check_branch
      %93 = sbr.rel (0) target = $region41
    $region40: #{tpu_custom_call.1} parent=1 // pred_region
      %95 = dma.done [#allocation4], 64
    $region41: #{tpu_custom_call.1} parent=1 // pred_fallthru
      _
    // Predicated region
    $region42: #{tpu_custom_call.1} parent=1 // pred_check
      _
    $region43: #{tpu_custom_call.1} parent=1 // pred_check_branch
      %97 = sbr.rel (0) target = $region45
    $region44: #{tpu_custom_call.1} parent=1 // pred_region
      %99 = dma.done [#allocation7], 1024
    $region45: #{tpu_custom_call.1} parent=1 // pred_fallthru
      _
    // Predicated region
    $region46: #{tpu_custom_call.1} parent=1 // pred_check
      _
    $region47: #{tpu_custom_call.1} parent=1 // pred_check_branch
      %101 = sbr.rel (0) target = $region49
    $region48: #{tpu_custom_call.1} parent=1 // pred_region
      %103 = dma.done [#allocation7], 1024
    $region49: #{tpu_custom_call.1} parent=1 // pred_fallthru
      _
    // Predicated region
    $region50: #{tpu_custom_call.1} parent=1 // pred_check
      _
    $region51: #{tpu_custom_call.1} parent=1 // pred_check_branch
      %105 = sbr.rel (0) target = $region53
    $region52: #{tpu_custom_call.1} parent=1 // pred_region
      %107 = dma.done [#allocation10], 1024
    $region53: #{tpu_custom_call.1} parent=1 // pred_fallthru
      _
    // Predicated region
    $region54: #{tpu_custom_call.1} parent=1 // pred_check
      _
    $region55: #{tpu_custom_call.1} parent=1 // pred_check_branch
      %109 = sbr.rel (0) target = $region57
    $region56: #{tpu_custom_call.1} parent=1 // pred_region
      %111 = dma.done [#allocation10], 1024
    $region57: #{tpu_custom_call.1} parent=1 // pred_fallthru
      _
    %v112 = vld [vmem:[#allocation3] sm:$0xf]
    %v113 = vld [vmem:[#allocation6] sm:$0xf]
    %v114 = vld [vmem:[#allocation6 + $0x4] sm:$0xf]
    %v115 = vld [vmem:[#allocation6 + $0x8] sm:$0xf]
    %v116 = vld [vmem:[#allocation6 + $0xc] sm:$0xf]
    %v117 = vld [vmem:[#allocation6 + $0x10] sm:$0xf]
    %v118 = vld [vmem:[#allocation6 + $0x14] sm:$0xf]
    %v119 = vld [vmem:[#allocation6 + $0x18] sm:$0xf]
    %v120 = vld [vmem:[#allocation6 + $0x1c] sm:$0xf]
    %v121 = vld [vmem:[#allocation6 + $0x20] sm:$0xf]
    %v122 = vld [vmem:[#allocation6 + $0x24] sm:$0xf]
    %v123 = vld [vmem:[#allocation6 + $0x28] sm:$0xf]
    %v124 = vld [vmem:[#allocation6 + $0x2c] sm:$0xf]
    %v125 = vld [vmem:[#allocation6 + $0x30] sm:$0xf]
    %v126 = vld [vmem:[#allocation6 + $0x34] sm:$0xf]
    %v127 = vld [vmem:[#allocation6 + $0x38] sm:$0xf]
    %v128 = vld [vmem:[#allocation6 + $0x3c] sm:$0xf]
    %v129 = vld [vmem:[%s2] sm:$0x1]
    %v131 = vperm.slane %v129, 0
    %v149 = vunpack.c.l.b16 %v113
    %v150 = vunpack.c.l.b16 %v114
    %v151 = vunpack.c.l.b16 %v115
    %v152 = vunpack.c.l.b16 %v116
    %v153 = vunpack.c.l.b16 %v117
    %v154 = vunpack.c.l.b16 %v118
    %v155 = vunpack.c.l.b16 %v119
    %v156 = vunpack.c.l.b16 %v120
    %v157 = vunpack.c.l.b16 %v121
    %v158 = vunpack.c.l.b16 %v122
    %v159 = vunpack.c.l.b16 %v123
    %v160 = vunpack.c.l.b16 %v124
    %v161 = vunpack.c.l.b16 %v125
    %v162 = vunpack.c.l.b16 %v126
    %v163 = vunpack.c.l.b16 %v127
    %v164 = vunpack.c.l.b16 %v128
    %v165 = vpack.c.b16 %v150, %v149
    %v166 = vpack.c.b16 %v152, %v151
    %v167 = vpack.c.b16 %v154, %v153
    %v168 = vpack.c.b16 %v156, %v155
    %v169 = vpack.c.b16 %v158, %v157
    %v170 = vpack.c.b16 %v160, %v159
    %v171 = vpack.c.b16 %v162, %v161
    %v172 = vpack.c.b16 %v164, %v163
    %181 = vmatpush.bf16.msra.mxu0 %v172
    %182 = vmatpush.bf16.msra.mxu0 %v171
    %183 = vmatpush.bf16.msra.mxu0 %v170
    %184 = vmatpush.bf16.msra.mxu0 %v169
    %185 = vmatpush.bf16.msra.mxu0 %v168
    %186 = vmatpush.bf16.msra.mxu0 %v167
    %187 = vmatpush.bf16.msra.mxu0 %v166
    %188 = vmatpush.bf16.msra.mxu0 %v165
    %189 = vmatmul.bf16.gmra.mxu0 %v112
    %v190 = vpop.f32.mrf.mxu0
    %v191 = vadd.f32 %v131, %v190
    %v192 = vpop.f32.mrf.mxu0
    %193 = vdwg.mxu0
    %v194 = vmax.f32 %v191, 0.0
    %v195 = vpack.c.bf16 %v194, %v194
    %v196 = vld [vmem:[#allocation8] sm:$0xf]
    %v197 = vld [vmem:[#allocation8 + $0x4] sm:$0xf]
    %v198 = vld [vmem:[#allocation8 + $0x8] sm:$0xf]
    %v199 = vld [vmem:[#allocation8 + $0xc] sm:$0xf]
    %v200 = vld [vmem:[#allocation8 + $0x10] sm:$0xf]
    %v201 = vld [vmem:[#allocation8 + $0x14] sm:$0xf]
    %v202 = vld [vmem:[#allocation8 + $0x18] sm:$0xf]
    %v203 = vld [vmem:[#allocation8 + $0x1c] sm:$0xf]
    %v204 = vld [vmem:[#allocation8 + $0x20] sm:$0xf]
    %v205 = vld [vmem:[#allocation8 + $0x24] sm:$0xf]
    %v206 = vld [vmem:[#allocation8 + $0x28] sm:$0xf]
    %v207 = vld [vmem:[#allocation8 + $0x2c] sm:$0xf]
    %v208 = vld [vmem:[#allocation8 + $0x30] sm:$0xf]
    %v209 = vld [vmem:[#allocation8 + $0x34] sm:$0xf]
    %v210 = vld [vmem:[#allocation8 + $0x38] sm:$0xf]
    %v211 = vld [vmem:[#allocation8 + $0x3c] sm:$0xf]
    %v212 = vld [vmem:[%s4] sm:$0x1]
    %v214 = vperm.slane %v212, 0
    %v232 = vunpack.c.l.b16 %v196
    %v233 = vunpack.c.l.b16 %v197
    %v234 = vunpack.c.l.b16 %v198
    %v235 = vunpack.c.l.b16 %v199
    %v236 = vunpack.c.l.b16 %v200
    %v237 = vunpack.c.l.b16 %v201
    %v238 = vunpack.c.l.b16 %v202
    %v239 = vunpack.c.l.b16 %v203
    %v240 = vunpack.c.l.b16 %v204
    %v241 = vunpack.c.l.b16 %v205
    %v242 = vunpack.c.l.b16 %v206
    %v243 = vunpack.c.l.b16 %v207
    %v244 = vunpack.c.l.b16 %v208
    %v245 = vunpack.c.l.b16 %v209
    %v246 = vunpack.c.l.b16 %v210
    %v247 = vunpack.c.l.b16 %v211
    %v248 = vpack.c.b16 %v233, %v232
    %v249 = vpack.c.b16 %v235, %v234
    %v250 = vpack.c.b16 %v237, %v236
    %v251 = vpack.c.b16 %v239, %v238
    %v252 = vpack.c.b16 %v241, %v240
    %v253 = vpack.c.b16 %v243, %v242
    %v254 = vpack.c.b16 %v245, %v244
    %v255 = vpack.c.b16 %v247, %v246
    %264 = vmatpush.bf16.msra.mxu0 %v255
    %265 = vmatpush.bf16.msra.mxu0 %v254
    %266 = vmatpush.bf16.msra.mxu0 %v253
    %267 = vmatpush.bf16.msra.mxu0 %v252
    %268 = vmatpush.bf16.msra.mxu0 %v251
    %269 = vmatpush.bf16.msra.mxu0 %v250
    %270 = vmatpush.bf16.msra.mxu0 %v249
    %271 = vmatpush.bf16.msra.mxu0 %v248
    %272 = vmatmul.bf16.gmra.mxu0 %v195
    %v273 = vpop.f32.mrf.mxu0
    %v274 = vadd.f32 %v214, %v273
    %v275 = vpop.f32.mrf.mxu0
    %276 = vdwg.mxu0
    %277 = vst [vmem:[#allocation12] sm:$0xff] %v274
    %278 = vst [vmem:[#allocation2] sm:$0xf] %v112
    %v279 = vpack.c.bf16 %v274, %v274
    %280 = vst [vmem:[#allocation2 + $0x4] sm:$0xf] %v279
    %v281 = vld [vmem:[#allocation2] sm:$0xf]
    %v282 = vld [vmem:[#allocation2 + $0x4] sm:$0xf]
    %v283 = vld [vmem:[#allocation9] sm:$0xf]
    %v284 = vld [vmem:[#allocation9 + $0x4] sm:$0xf]
    %v285 = vld [vmem:[#allocation9 + $0x8] sm:$0xf]
    %v286 = vld [vmem:[#allocation9 + $0xc] sm:$0xf]
    %v287 = vld [vmem:[#allocation9 + $0x10] sm:$0xf]
    %v288 = vld [vmem:[#allocation9 + $0x14] sm:$0xf]
    %v289 = vld [vmem:[#allocation9 + $0x18] sm:$0xf]
    %v290 = vld [vmem:[#allocation9 + $0x1c] sm:$0xf]
    %v291 = vld [vmem:[#allocation9 + $0x20] sm:$0xf]
    %v292 = vld [vmem:[#allocation9 + $0x24] sm:$0xf]
    %v293 = vld [vmem:[#allocation9 + $0x28] sm:$0xf]
    %v294 = vld [vmem:[#allocation9 + $0x2c] sm:$0xf]
    %v295 = vld [vmem:[#allocation9 + $0x30] sm:$0xf]
    %v296 = vld [vmem:[#allocation9 + $0x34] sm:$0xf]
    %v297 = vld [vmem:[#allocation9 + $0x38] sm:$0xf]
    %v298 = vld [vmem:[#allocation9 + $0x3c] sm:$0xf]
    %v299 = vld [vmem:[%s6] sm:$0x1]
    %v301 = vperm.slane %v299, 0
    %v305 = vunpack.c.l.b16 %v281
    %v306 = vunpack.c.l.b16 %v282
    %v307 = vpack.c.b16 %v306, %v305
    %v325 = vunpack.c.l.b16 %v283
    %v326 = vunpack.c.l.b16 %v284
    %v327 = vunpack.c.l.b16 %v285
    %v328 = vunpack.c.l.b16 %v286
    %v329 = vunpack.c.l.b16 %v287
    %v330 = vunpack.c.l.b16 %v288
    %v331 = vunpack.c.l.b16 %v289
    %v332 = vunpack.c.l.b16 %v290
    %v333 = vunpack.c.l.b16 %v291
    %v334 = vunpack.c.l.b16 %v292
    %v335 = vunpack.c.l.b16 %v293
    %v336 = vunpack.c.l.b16 %v294
    %v337 = vunpack.c.l.b16 %v295
    %v338 = vunpack.c.l.b16 %v296
    %v339 = vunpack.c.l.b16 %v297
    %v340 = vunpack.c.l.b16 %v298
    %v341 = vpack.c.b16 %v326, %v325
    %v342 = vpack.c.b16 %v328, %v327
    %v343 = vpack.c.b16 %v330, %v329
    %v344 = vpack.c.b16 %v332, %v331
    %v345 = vpack.c.b16 %v334, %v333
    %v346 = vpack.c.b16 %v336, %v335
    %v347 = vpack.c.b16 %v338, %v337
    %v348 = vpack.c.b16 %v340, %v339
    %357 = vmatpush.bf16.msra.mxu0 %v348
    %358 = vmatpush.bf16.msra.mxu0 %v347
    %359 = vmatpush.bf16.msra.mxu0 %v346
    %360 = vmatpush.bf16.msra.mxu0 %v345
    %361 = vmatpush.bf16.msra.mxu0 %v344
    %362 = vmatpush.bf16.msra.mxu0 %v343
    %363 = vmatpush.bf16.msra.mxu0 %v342
    %364 = vmatpush.bf16.msra.mxu0 %v341
    %365 = vmatmul.bf16.gmra.mxu0 %v307
    %v366 = vpop.f32.mrf.mxu0
    %v367 = vadd.f32 %v301, %v366
    %v368 = vpop.f32.mrf.mxu0
    %v369 = vadd.f32 %v301, %v368
    %370 = vdwg.mxu0
    %v371 = vmax.f32 %v367, 0.0
    %v372 = vmax.f32 %v369, 0.0
    %v373 = vpack.c.bf16 %v372, %v371
    %v374 = vld [vmem:[#allocation11] sm:$0xf]
    %v375 = vld [vmem:[#allocation11 + $0x4] sm:$0xf]
    %v376 = vld [vmem:[#allocation11 + $0x8] sm:$0xf]
    %v377 = vld [vmem:[#allocation11 + $0xc] sm:$0xf]
    %v378 = vld [vmem:[#allocation11 + $0x10] sm:$0xf]
    %v379 = vld [vmem:[#allocation11 + $0x14] sm:$0xf]
    %v380 = vld [vmem:[#allocation11 + $0x18] sm:$0xf]
    %v381 = vld [vmem:[#allocation11 + $0x1c] sm:$0xf]
    %v382 = vld [vmem:[#allocation11 + $0x20] sm:$0xf]
    %v383 = vld [vmem:[#allocation11 + $0x24] sm:$0xf]
    %v384 = vld [vmem:[#allocation11 + $0x28] sm:$0xf]
    %v385 = vld [vmem:[#allocation11 + $0x2c] sm:$0xf]
    %v386 = vld [vmem:[#allocation11 + $0x30] sm:$0xf]
    %v387 = vld [vmem:[#allocation11 + $0x34] sm:$0xf]
    %v388 = vld [vmem:[#allocation11 + $0x38] sm:$0xf]
    %v389 = vld [vmem:[#allocation11 + $0x3c] sm:$0xf]
    %v390 = vld [vmem:[%s8] sm:$0x1]
    %v392 = vperm.slane %v390, 0
    %v410 = vunpack.c.l.b16 %v374
    %v411 = vunpack.c.l.b16 %v375
    %v412 = vunpack.c.l.b16 %v376
    %v413 = vunpack.c.l.b16 %v377
    %v414 = vunpack.c.l.b16 %v378
    %v415 = vunpack.c.l.b16 %v379
    %v416 = vunpack.c.l.b16 %v380
    %v417 = vunpack.c.l.b16 %v381
    %v418 = vunpack.c.l.b16 %v382
    %v419 = vunpack.c.l.b16 %v383
    %v420 = vunpack.c.l.b16 %v384
    %v421 = vunpack.c.l.b16 %v385
    %v422 = vunpack.c.l.b16 %v386
    %v423 = vunpack.c.l.b16 %v387
    %v424 = vunpack.c.l.b16 %v388
    %v425 = vunpack.c.l.b16 %v389
    %v426 = vpack.c.b16 %v411, %v410
    %v427 = vpack.c.b16 %v413, %v412
    %v428 = vpack.c.b16 %v415, %v414
    %v429 = vpack.c.b16 %v417, %v416
    %v430 = vpack.c.b16 %v419, %v418
    %v431 = vpack.c.b16 %v421, %v420
    %v432 = vpack.c.b16 %v423, %v422
    %v433 = vpack.c.b16 %v425, %v424
    %442 = vmatpush.bf16.msra.mxu0 %v433
    %443 = vmatpush.bf16.msra.mxu0 %v432
    %444 = vmatpush.bf16.msra.mxu0 %v431
    %445 = vmatpush.bf16.msra.mxu0 %v430
    %446 = vmatpush.bf16.msra.mxu0 %v429
    %447 = vmatpush.bf16.msra.mxu0 %v428
    %448 = vmatpush.bf16.msra.mxu0 %v427
    %449 = vmatpush.bf16.msra.mxu0 %v426
    %450 = vmatmul.bf16.gmra.mxu0 %v373
    %v451 = vpop.f32.mrf.mxu0
    %v452 = vadd.f32 %v392, %v451
    %v453 = vpop.f32.mrf.mxu0
    %v454 = vadd.f32 %v392, %v453
    %455 = vdwg.mxu0
    %456 = vst [vmem:[#allocation13] sm:$0xff] %v452
    %457 = vst [vmem:[#allocation13 + $0x8] sm:$0xff] %v454
    // Predicated region
    $region58: #{tpu_custom_call.1} parent=1 // pred_check
      _
    $region59: #{tpu_custom_call.1} parent=1 // pred_check_branch
      %459 = sbr.rel (0) target = $region61
    $region60: #{tpu_custom_call.1} parent=1 // pred_region
      %461 = vsyncadd [#allocation5], 0
      %s463 = sshll.u32 [#allocation12], 4
      %s464 = int_to_ptr.vmem [resolvable:$true] %s463
      %s465 = sshll.u32 %s9, 4
      %s466 = int_to_ptr.hbm [resolvable:$true] %s465
      %468 = dma.vmem_to_hbm [thread:$0]  %s464, 128, %s466, [#allocation5]
    $region61: #{tpu_custom_call.1} parent=1 // pred_fallthru
      _
    // Predicated region
    $region62: #{tpu_custom_call.1} parent=1 // pred_check
      _
    $region63: #{tpu_custom_call.1} parent=1 // pred_check_branch
      %470 = sbr.rel (0) target = $region65
    $region64: #{tpu_custom_call.1} parent=1 // pred_region
      %472 = vsyncadd [#allocation14], 0
      %s473 = sshll.u32 [#allocation13], 4
      %s474 = int_to_ptr.vmem [resolvable:$true] %s473
      %s475 = sshll.u32 %s10, 4
      %s476 = int_to_ptr.hbm [resolvable:$true] %s475
      %481 = dma.vmem_to_hbm [thread:$0]  %s474, 256, %s476, [#allocation14], 128, 128, 8
    $region65: #{tpu_custom_call.1} parent=1 // pred_fallthru
      _
    // Predicated region
    $region66: #{tpu_custom_call.1} parent=1 // pred_check
      _
    $region67: #{tpu_custom_call.1} parent=1 // pred_check_branch
      %483 = sbr.rel (0) target = $region69
    $region68: #{tpu_custom_call.1} parent=1 // pred_region
      %485 = dma.done [#allocation5], 128
    $region69: #{tpu_custom_call.1} parent=1 // pred_fallthru
      _
    // Predicated region
    $region70: #{tpu_custom_call.1} parent=1 // pred_check
      _
    $region71: #{tpu_custom_call.1} parent=1 // pred_check_branch
      %487 = sbr.rel (0) target = $region73
    $region72: #{tpu_custom_call.1} parent=1 // pred_region
      %489 = dma.done [#allocation14], 256
    $region73: #{tpu_custom_call.1} parent=1 // pred_fallthru
      _
    %490 = vsyncpa [#allocation4], 1
    %491 = vsyncpa [#allocation7], 1
    %492 = vsyncpa [#allocation10], 1
    %493 = vsyncpa [#allocation5], 1
    %494 = vsyncpa [#allocation14], 1

</llo_original>
